<compile_context>
chip_gen: v6e
topology: v6e:2x2x1
jax: 0.10.0
libtpu: 0.0.40
codegen_flags: <defaults>
</compile_context>

<pallas_src>
import jax
import jax.numpy as jnp
from jax.experimental import pallas as pl
from jax.experimental.pallas import tpu as pltpu

_LANE = 128  # TPU lane width


def _object_visible_kernel(x_ref, o_ref):
    # x_ref / o_ref: (tr, 128) lane-dense tiles in VMEM. Pure VPU elementwise.
    o_ref[...] = jnp.ceil(x_ref[...] - jnp.asarray(0.25, dtype=x_ref.dtype))


def object_visible(x, *, block_rows=512, min_pallas_elems=64 * _LANE,
                   force_pallas=False):
    """x: [B, O, T, F] float array -> [B, O, T, 1] = ceil(x[..., -1:] - 0.25)."""
    assert block_rows % 8 == 0, "block_rows must be a multiple of 8 (sublanes)"
    B, O, T, F = x.shape
    N = B * O * T

    # Slice the mask channel in the wrapper: the Pallas kernel then moves only
    # 1/F of the input bytes. (Upstream re-layout of the mask channel would be
    # even better but is outside this module's control.)
    mask = x[..., F - 1]                     # (B, O, T)

    # Tiny shapes: let XLA fuse slice+ceil; a pallas_call launch would dominate.
    if not force_pallas and N < min_pallas_elems:
        return jnp.ceil(mask - jnp.asarray(0.25, dtype=x.dtype))[..., None]

    # Collapse to a lane-dense 2D layout (rows, 128), padding as needed.
    flat = mask.reshape(-1)                  # (N,)
    rows = pl.cdiv(N, _LANE)
    if rows <= block_rows:
        # Single block; block shape equals full array dims so any `rows` is OK.
        tr = rows
        rows_p = rows
    else:
        tr = block_rows                      # multiple of 8 -> (8,128) rule OK
        rows_p = pl.cdiv(rows, tr) * tr
    n_pad = rows_p * _LANE
    if n_pad != N:
        flat = jnp.pad(flat, (0, n_pad - N))
    x2 = flat.reshape(rows_p, _LANE)

    grid = (rows_p // tr,)
    out2 = pl.pallas_call(
        _object_visible_kernel,
        out_shape=jax.ShapeDtypeStruct((rows_p, _LANE), x.dtype),
        grid_spec=pltpu.PrefetchScalarGridSpec(
            num_scalar_prefetch=0,
            grid=grid,
            in_specs=[pl.BlockSpec((tr, _LANE), lambda i: (i, 0))],
            out_specs=pl.BlockSpec((tr, _LANE), lambda i: (i, 0)),
        ),
        compiler_params=pltpu.CompilerParams(
            dimension_semantics=("parallel",),
        ),
    )(x2)

    # Drop padding and restore the [B, O, T, 1] module output shape.
    return out2.reshape(-1)[:N].reshape(B, O, T, 1)


if __name__ == "__main__":
    # ObjectVisible.__init__(net_width, num_objects, num_timesteps) registers no
    # parameters, so there are no weights to initialize.
    key = jax.random.PRNGKey(0)

    # Small demo shape consistent with the module's [B, objects, timesteps, F].
    B, num_objects, num_timesteps, net_width = 2, 4, 8, 32
    x = jax.random.uniform(
        key, (B, num_objects, num_timesteps, net_width), dtype=jnp.float32
    )

    # Force the Pallas path so the kernel is actually exercised at demo size.
    out = object_visible(x, force_pallas=True)
    out = jax.block_until_ready(out)
    ref = jnp.ceil(x[:, :, :, -1:] - 0.25)
    assert out.shape == (B, num_objects, num_timesteps, 1)
    assert jnp.allclose(out, ref), "mismatch vs reference (single-block path)"

    # Exercise the tiled (grid > 1) path cheaply with a small block size.
    x2 = jax.random.uniform(
        jax.random.PRNGKey(1), (2, 4, 256, 16), dtype=jnp.float32
    )
    out2 = object_visible(x2, block_rows=8, force_pallas=True)
    out2 = jax.block_until_ready(out2)
    ref2 = jnp.ceil(x2[:, :, :, -1:] - 0.25)
    assert out2.shape == (2, 4, 256, 1)
    assert jnp.allclose(out2, ref2), "mismatch vs reference (tiled path)"

    print("KERNEL_OK")
</pallas_src>

<mosaic_0001>
module attributes {stable_mosaic.version = 11 : i64} {
  func.func @_object_visible_kernel(%arg0: i32, %arg1: memref<1x128xf32, #tpu.memory_space<vmem>>, %arg2: memref<1x128xf32, #tpu.memory_space<vmem>>) attributes {dimension_semantics = [#tpu.dimension_semantics<parallel>], iteration_bounds = array<i64: 1>, scalar_prefetch = 0 : i64, scratch_operands = 0 : i64, tpu.core_type = #tpu.core_type<tc>, window_params = [{transform_indices = @transform_0, window_bounds = array<i64: 1, 128>}, {transform_indices = @transform_1, window_bounds = array<i64: 1, 128>}]} {
    %c0 = arith.constant 0 : index
    %c0_0 = arith.constant 0 : index
    %0 = vector.load %arg1[%c0, %c0_0] : memref<1x128xf32, #tpu.memory_space<vmem>>, vector<1x128xf32>
    %cst = arith.constant 2.500000e-01 : f32
    %1 = vector.broadcast %cst : f32 to vector<1x128xf32>
    %2 = arith.subf %0, %1 : vector<1x128xf32>
    %3 = math.ceil %2 : vector<1x128xf32>
    %c0_1 = arith.constant 0 : index
    %c0_2 = arith.constant 0 : index
    %4 = vector.load %arg2[%c0_1, %c0_2] : memref<1x128xf32, #tpu.memory_space<vmem>>, vector<1x128xf32>
    tpu.vector_store %arg2[%c0_1, %c0_2], %3 {strides = array<i32>} : memref<1x128xf32, #tpu.memory_space<vmem>>, vector<1x128xf32>,
    return
  }
  func.func @transform_0(%arg0: i32) -> (i32, i32) {
    %c0_i32 = arith.constant 0 : i32
    %c0_i32_0 = arith.constant 0 : i32
    return %arg0, %c0_i32 : i32, i32
  }
  func.func @transform_1(%arg0: i32) -> (i32, i32) {
    %c0_i32 = arith.constant 0 : i32
    %c0_i32_0 = arith.constant 0 : i32
    return %arg0, %c0_i32 : i32, i32
  }
}

</mosaic_0001>

<llo_original>
// kernel: tpu_custom_call.1
$region0: #{tpu_custom_call.1}
  #allocation0 [shape = 'u32[]', space=smem, size = 0x4, offset = 0x4, fixed_abs, tag = 'smem constant byte address 0x4 - core index']
  #allocation1 [shape = 'u32[144,128]{1,0:T(1,128)}', space=vmem, size = 0x12000, scoped, tag = 'internal scratch']
  %s0 = inlined_call_operand.hbm [shape: f32[1,128], index: 0, kind: input, shape index: {}]
  %s1 = inlined_call_operand.hbm [shape: f32[1,128], index: 1, kind: output, shape index: {}]
  %s2 = sld [smem:[#allocation0]]
  $region18: #{tpu_custom_call.1} parent=0
    _
  %s4 = ssub.s32 1, %s2
  %s5 = scalar_select 0, %s4, %s2
  $region1: #{tpu_custom_call.1} parent=0
    #allocation2 [shape = 'u8[512]{0}', space=vmem, size = 0x400, scoped, tag = 'input window, operand 0, single buffered']
    #allocation3 [shape = 's32[1]{0}', space=sflag, size = 0x4, scoped, tag = 'scoped memory for tpu_custom_call.1']
    #allocation4 [shape = 's32[1]{0}', space=sflag, size = 0x4, scoped, tag = 'scoped memory for tpu_custom_call.1']
    #allocation5 [shape = 'u8[512]{0}', space=vmem, size = 0x400, scoped, tag = 'output window, operand 0, single buffered']
    %6 = vsyncpa [#allocation3], 0
    %7 = vsyncpa [#allocation4], 0
    // Predicated region
    $region2: #{tpu_custom_call.1} parent=1 // pred_check
      _
    $region3: #{tpu_custom_call.1} parent=1 // pred_check_branch
      %9 = sbr.rel (0) target = $region5
    $region4: #{tpu_custom_call.1} parent=1 // pred_region
      %s11 = ssub.s32 16, 16
      %12 = vsyncadd [#allocation3], %s11
      %s14 = sshll.u32 [#allocation2], 4
      %s15 = int_to_ptr.vmem [resolvable:$true] %s14
      %17 = dma.hbm_to_vmem [thread:$0]  %s0, 16, %s15, [#allocation3]
    $region5: #{tpu_custom_call.1} parent=1 // pred_fallthru
      _
    // Predicated region
    $region6: #{tpu_custom_call.1} parent=1 // pred_check
      _
    $region7: #{tpu_custom_call.1} parent=1 // pred_check_branch
      %19 = sbr.rel (0) target = $region9
    $region8: #{tpu_custom_call.1} parent=1 // pred_region
      %20 = dma.done [#allocation3], 16
    $region9: #{tpu_custom_call.1} parent=1 // pred_fallthru
      _
    %v21 = vld [vmem:[#allocation2] sm:$0x1]
    %v22 = vsub.f32 %v21, 0.25
    %v23 = vceil.f32 %v22
    %24 = vst [vmem:[#allocation5] sm:$0x1] %v23
    // Predicated region
    $region10: #{tpu_custom_call.1} parent=1 // pred_check
      _
    $region11: #{tpu_custom_call.1} parent=1 // pred_check_branch
      %26 = sbr.rel (0) target = $region13
    $region12: #{tpu_custom_call.1} parent=1 // pred_region
      %s28 = ssub.s32 16, 16
      %29 = vsyncadd [#allocation4], %s28
      %s31 = sshll.u32 [#allocation5], 4
      %s32 = int_to_ptr.vmem [resolvable:$true] %s31
      %34 = dma.vmem_to_hbm [thread:$0]  %s32, 16, %s1, [#allocation4]
    $region13: #{tpu_custom_call.1} parent=1 // pred_fallthru
      _
    // Predicated region
    $region14: #{tpu_custom_call.1} parent=1 // pred_check
      _
    $region15: #{tpu_custom_call.1} parent=1 // pred_check_branch
      %36 = sbr.rel (0) target = $region17
    $region16: #{tpu_custom_call.1} parent=1 // pred_region
      %37 = dma.done [#allocation4], 16
    $region17: #{tpu_custom_call.1} parent=1 // pred_fallthru
      _
    %38 = vsyncpa [#allocation3], 1
    %39 = vsyncpa [#allocation4], 1

</llo_original>
